<compile_context>
chip_gen: v5e
topology: v5e:2x2
jax: 0.10.0
libtpu: 0.0.40
codegen_flags: <defaults>
</compile_context>

<pallas_src>
import jax
import jax.numpy as jnp
from jax.experimental import pallas as pl
from jax.experimental.pallas import tpu as pltpu


def _make_conv_prelu_kernel(Wp, TH):
    """Kernel factory closing over the padded row width Wp=W+2 and tile rows TH."""
    L = TH * Wp  # per-tile conv output length (padded-width layout)

    def kernel(x_ref, w_ref, b_ref, a_ref, o_ref):
        # x_ref: (1, 1, C, (TH+2)*Wp + 2)  halo'd input row tile (compute dtype)
        # w_ref: (9, Co, C)                conv weight, k = kh*3 + kw
        # b_ref: (Co, 1)                   conv bias (f32, VMEM)
        # a_ref: (1,)                      shared PReLU alpha (f32, SMEM)
        # o_ref: (1, 1, Co, TH*Wp)         conv + PReLU output (padded-width)
        acc = None
        for k in range(9):                         # statically unrolled
            kh, kw = divmod(k, 3)
            start = kh * Wp + kw                   # static flat shift
            xs = x_ref[0, 0, :, start:start + L]   # (C, L)
            p = jnp.dot(w_ref[k], xs, preferred_element_type=jnp.float32)
            acc = p if acc is None else acc + p    # f32 accumulation
        acc = acc + b_ref[...]                     # (Co, 1) broadcast
        alpha = a_ref[0]
        out = jnp.where(acc >= 0, acc, alpha * acc)  # PReLU, f32 epilogue
        o_ref[0, 0] = out.astype(o_ref.dtype)

    return kernel


def _pick_row_tile(H, W, C, Co, itemsize, budget=2 * 1024 * 1024):
    """Rows of output per grid step: biggest tile under ~2 MB (in+out block)
    while keeping >= 2 row tiles per image (v7x has 2 TCs; batch-1 inference)."""
    Wp = W + 2

    def tile_bytes(th):
        return (C * ((th + 2) * Wp + 2) + Co * th * Wp) * itemsize

    hi = max(1, H // 2)
    best_any = 1
    for t in range(1, hi + 1):
        if tile_bytes(t) <= budget:
            best_any = t
    # Prefer an exact divisor of H (no padded/wasted rows) unless it is much
    # smaller than what the VMEM budget allows.
    best_div = 1
    for t in range(1, best_any + 1):
        if H % t == 0:
            best_div = t
    return best_div if best_div * 2 >= best_any else best_any


def upsample_block(x, weight, bias, alpha, up_scale, *,
                   row_tile=None, compute_dtype=jnp.bfloat16, out_dtype=None):
    """x: (N, C, H, W).  weight: (C*r^2, C, 3, 3) OIHW.  bias: (C*r^2,).
    alpha: shared scalar PReLU parameter.  Returns (N, C, H*r, W*r)."""
    N, C, H, W = x.shape
    r = int(up_scale)
    Co = C * r * r
    assert weight.shape == (Co, C, 3, 3)
    out_dtype = x.dtype if out_dtype is None else out_dtype

    # PReLU is applied before the pixel shuffle inside the kernel; this is only
    # equivalent to the PyTorch order (shuffle -> PReLU) because nn.PReLU()
    # uses a single shared alpha.
    alpha = jnp.asarray(alpha, jnp.float32).reshape(-1)
    assert alpha.shape == (1,), "only the shared-scalar nn.PReLU() is supported"

    itemsize = jnp.dtype(compute_dtype).itemsize
    Wp = W + 2
    TH = _pick_row_tile(H, W, C, Co, itemsize) if row_tile is None else int(row_tile)
    T = -(-H // TH)                 # number of row tiles
    Hpad = T * TH                   # rows incl. bottom padding (trimmed at the end)
    L = TH * Wp                     # per-tile conv output length
    Lp = (TH + 2) * Wp + 2          # per-tile halo'd input length

    # Halo'd row tiles of the zero-padded input: (N, T, C, Lp).  XLA fuses the
    # pad + T overlapping slices + stack into one gather pass (~1.1x input
    # bytes), replacing the 9x im2col slab of the previous version.
    x_pad = jnp.pad(x, ((0, 0), (0, 0), (1, Hpad - H + 2), (1, 1)))
    x_flat = x_pad.reshape(N, C, (Hpad + 3) * Wp)
    x_tiled = jnp.stack(
        [jax.lax.slice_in_dim(x_flat, t * TH * Wp, t * TH * Wp + Lp, axis=2)
         for t in range(T)], axis=1).astype(compute_dtype)

    # Weight as 9 resident (Co, C) blocks, k = kh*3 + kw (matches the in-kernel
    # flat shift kh*Wp + kw).  Bias stays f32 for the epilogue.
    w9 = weight.transpose(2, 3, 0, 1).reshape(9, Co, C).astype(compute_dtype)
    b2 = bias.reshape(Co, 1).astype(jnp.float32)

    conv_out = pl.pallas_call(
        _make_conv_prelu_kernel(Wp, TH),
        out_shape=jax.ShapeDtypeStruct((N, T, Co, L), compute_dtype),
        grid_spec=pltpu.PrefetchScalarGridSpec(
            num_scalar_prefetch=0,
            grid=(N, T),
            in_specs=[
                # NOTE: if a profile shows exposed input DMA, add
                # pipeline_mode=pl.Buffered(3) to this spec only.
                pl.BlockSpec((1, 1, C, Lp), lambda n, t: (n, t, 0, 0)),
                pl.BlockSpec((9, Co, C), lambda n, t: (0, 0, 0)),
                pl.BlockSpec((Co, 1), lambda n, t: (0, 0)),
                pl.BlockSpec(memory_space=pltpu.MemorySpace.SMEM),
            ],
            out_specs=pl.BlockSpec((1, 1, Co, L), lambda n, t: (n, t, 0, 0)),
        ),
        compiler_params=pltpu.CompilerParams(
            dimension_semantics=("parallel", "parallel"),
            vmem_limit_bytes=32 * 1024 * 1024),
    )(x_tiled, w9, b2, alpha)

    # PixelShuffle(r): strip the 2 garbage columns per row, interleave the r^2
    # sub-channels.  Single XLA transpose pass on compute-dtype (bf16) data.
    # TODO(synk): fuse this interleave into the kernel's output store.
    y = conv_out.reshape(N, T, C, r, r, TH, Wp)[..., :W]   # (N,T,C,r,r,TH,W)
    y = jnp.transpose(y, (0, 2, 1, 5, 3, 6, 4))            # (N,C,T,TH,r,W,r)
    y = y.reshape(N, C, Hpad * r, W * r)[:, :, :H * r, :]
    return y.astype(out_dtype)


def _reference(x, weight, bias, alpha, up_scale):
    # Pure-JAX reference matching PyTorch semantics (conv -> shuffle -> PReLU).
    conv = jax.lax.conv_general_dilated(
        x, weight, window_strides=(1, 1), padding="SAME",
        dimension_numbers=("NCHW", "OIHW", "NCHW"))
    conv = conv + bias.reshape(1, -1, 1, 1)
    N, Co, H, W = conv.shape
    r = up_scale
    C = Co // (r * r)
    y = conv.reshape(N, C, r, r, H, W)
    y = jnp.transpose(y, (0, 1, 4, 2, 5, 3)).reshape(N, C, H * r, W * r)
    return jnp.where(y >= 0, y, alpha * y)


if __name__ == "__main__":
    key = jax.random.PRNGKey(0)
    N, C, H, W = 2, 4, 16, 16
    up_scale = 2
    Co = C * up_scale * up_scale

    kx, kw, kb = jax.random.split(key, 3)
    x = jax.random.normal(kx, (N, C, H, W), dtype=jnp.float32)
    # Deterministic init mimicking PyTorch Conv2d default (uniform +/- 1/sqrt(fan_in)).
    fan_in = C * 3 * 3
    bound = 1.0 / (fan_in ** 0.5)
    weight = jax.random.uniform(kw, (Co, C, 3, 3), jnp.float32, -bound, bound)
    bias = jax.random.uniform(kb, (Co,), jnp.float32, -bound, bound)
    alpha = jnp.float32(0.25)  # PReLU default init

    ref = _reference(x, weight, bias, alpha, up_scale)

    # f32 path, divisor row tile (T = 2): tight-tolerance check.
    out = upsample_block(x, weight, bias, alpha, up_scale,
                         row_tile=8, compute_dtype=jnp.float32)
    out = jax.block_until_ready(out)
    assert out.shape == (N, C, H * up_scale, W * up_scale)
    assert jnp.allclose(out, ref, rtol=1e-4, atol=1e-5)

    # f32 path, non-divisor row tile (exercises the bottom-row pad + trim path).
    out_nd = upsample_block(x, weight, bias, alpha, up_scale,
                            row_tile=6, compute_dtype=jnp.float32)
    out_nd = jax.block_until_ready(out_nd)
    assert jnp.allclose(out_nd, ref, rtol=1e-4, atol=1e-5)

    # Default bf16 MXU path (recommended on v5e/v6e/v7x): bf16 operands and
    # conv output, f32 accumulation + f32 bias/PReLU epilogue; auto row tile.
    out_bf16 = upsample_block(x, weight, bias, alpha, up_scale)
    out_bf16 = jax.block_until_ready(out_bf16)
    assert out_bf16.shape == (N, C, H * up_scale, W * up_scale)
    assert jnp.allclose(out_bf16, ref, rtol=5e-2, atol=5e-2)

    print("KERNEL_OK")
</pallas_src>

<mosaic_0001>
module attributes {stable_mosaic.version = 11 : i64} {
  func.func @kernel(%arg0: i32, %arg1: i32, %arg2: memref<1x1x4x182xf32, #tpu.memory_space<vmem>>, %arg3: memref<9x16x4xf32, #tpu.memory_space<vmem>>, %arg4: memref<16x1xf32, #tpu.memory_space<vmem>>, %arg5: memref<1xf32, #tpu.memory_space<smem>>, %arg6: memref<1x1x16x144xf32, #tpu.memory_space<vmem>>) attributes {dimension_semantics = [#tpu.dimension_semantics<parallel>, #tpu.dimension_semantics<parallel>], iteration_bounds = array<i64: 2, 2>, scalar_prefetch = 0 : i64, scratch_operands = 0 : i64, tpu.core_type = #tpu.core_type<tc>, window_params = [{transform_indices = @transform_0, window_bounds = array<i64: 1, 1, 4, 182>}, {pipeline_mode = #tpu.pipeline_mode<synchronous>, transform_indices = @transform_1, window_bounds = array<i64: 9, 16, 4>}, {pipeline_mode = #tpu.pipeline_mode<synchronous>, transform_indices = @transform_2, window_bounds = array<i64: 16, 1>}, {transform_indices = @transform_3, window_bounds = array<i64: 1>}, {transform_indices = @transform_4, window_bounds = array<i64: 1, 1, 16, 144>}]} {
    %c0 = arith.constant 0 : index
    %c0_0 = arith.constant 0 : index
    %c0_1 = arith.constant 0 : index
    %c0_2 = arith.constant 0 : index
    %0 = vector.load %arg2[%c0, %c0_0, %c0_1, %c0_2] : memref<1x1x4x182xf32, #tpu.memory_space<vmem>>, vector<1x1x4x144xf32>
    %1 = vector.shape_cast %0 : vector<1x1x4x144xf32> to vector<4x144xf32>
    %c0_3 = arith.constant 0 : index
    %c0_4 = arith.constant 0 : index
    %c0_5 = arith.constant 0 : index
    %2 = vector.load %arg3[%c0_3, %c0_4, %c0_5] : memref<9x16x4xf32, #tpu.memory_space<vmem>>, vector<1x16x4xf32>
    %3 = vector.shape_cast %2 : vector<1x16x4xf32> to vector<16x4xf32>
    %cst = arith.constant dense<0.000000e+00> : vector<16x144xf32>
    %4 = tpu.matmul %3, %1, %cst {dimension_numbers = #tpu.dot_dimension_numbers<[1], [0], [0], [1], [0, 0, 1, 1], [], []>} : vector<16x4xf32>, vector<4x144xf32>, vector<16x144xf32> -> vector<16x144xf32>
    %c0_6 = arith.constant 0 : index
    %c0_7 = arith.constant 0 : index
    %c0_8 = arith.constant 0 : index
    %c1 = arith.constant 1 : index
    %5 = vector.load %arg2[%c0_6, %c0_7, %c0_8, %c1] : memref<1x1x4x182xf32, #tpu.memory_space<vmem>>, vector<1x1x4x144xf32>
    %6 = vector.shape_cast %5 : vector<1x1x4x144xf32> to vector<4x144xf32>
    %c1_9 = arith.constant 1 : index
    %c0_10 = arith.constant 0 : index
    %c0_11 = arith.constant 0 : index
    %7 = vector.load %arg3[%c1_9, %c0_10, %c0_11] : memref<9x16x4xf32, #tpu.memory_space<vmem>>, vector<1x16x4xf32>
    %8 = vector.shape_cast %7 : vector<1x16x4xf32> to vector<16x4xf32>
    %cst_12 = arith.constant dense<0.000000e+00> : vector<16x144xf32>
    %9 = tpu.matmul %8, %6, %cst_12 {dimension_numbers = #tpu.dot_dimension_numbers<[1], [0], [0], [1], [0, 0, 1, 1], [], []>} : vector<16x4xf32>, vector<4x144xf32>, vector<16x144xf32> -> vector<16x144xf32>
    %10 = arith.addf %4, %9 : vector<16x144xf32>
    %c0_13 = arith.constant 0 : index
    %c0_14 = arith.constant 0 : index
    %c0_15 = arith.constant 0 : index
    %c2 = arith.constant 2 : index
    %11 = vector.load %arg2[%c0_13, %c0_14, %c0_15, %c2] : memref<1x1x4x182xf32, #tpu.memory_space<vmem>>, vector<1x1x4x144xf32>
    %12 = vector.shape_cast %11 : vector<1x1x4x144xf32> to vector<4x144xf32>
    %c2_16 = arith.constant 2 : index
    %c0_17 = arith.constant 0 : index
    %c0_18 = arith.constant 0 : index
    %13 = vector.load %arg3[%c2_16, %c0_17, %c0_18] : memref<9x16x4xf32, #tpu.memory_space<vmem>>, vector<1x16x4xf32>
    %14 = vector.shape_cast %13 : vector<1x16x4xf32> to vector<16x4xf32>
    %cst_19 = arith.constant dense<0.000000e+00> : vector<16x144xf32>
    %15 = tpu.matmul %14, %12, %cst_19 {dimension_numbers = #tpu.dot_dimension_numbers<[1], [0], [0], [1], [0, 0, 1, 1], [], []>} : vector<16x4xf32>, vector<4x144xf32>, vector<16x144xf32> -> vector<16x144xf32>
    %16 = arith.addf %10, %15 : vector<16x144xf32>
    %c0_20 = arith.constant 0 : index
    %c0_21 = arith.constant 0 : index
    %c0_22 = arith.constant 0 : index
    %c18 = arith.constant 18 : index
    %17 = vector.load %arg2[%c0_20, %c0_21, %c0_22, %c18] : memref<1x1x4x182xf32, #tpu.memory_space<vmem>>, vector<1x1x4x144xf32>
    %18 = vector.shape_cast %17 : vector<1x1x4x144xf32> to vector<4x144xf32>
    %c3 = arith.constant 3 : index
    %c0_23 = arith.constant 0 : index
    %c0_24 = arith.constant 0 : index
    %19 = vector.load %arg3[%c3, %c0_23, %c0_24] : memref<9x16x4xf32, #tpu.memory_space<vmem>>, vector<1x16x4xf32>
    %20 = vector.shape_cast %19 : vector<1x16x4xf32> to vector<16x4xf32>
    %cst_25 = arith.constant dense<0.000000e+00> : vector<16x144xf32>
    %21 = tpu.matmul %20, %18, %cst_25 {dimension_numbers = #tpu.dot_dimension_numbers<[1], [0], [0], [1], [0, 0, 1, 1], [], []>} : vector<16x4xf32>, vector<4x144xf32>, vector<16x144xf32> -> vector<16x144xf32>
    %22 = arith.addf %16, %21 : vector<16x144xf32>
    %c0_26 = arith.constant 0 : index
    %c0_27 = arith.constant 0 : index
    %c0_28 = arith.constant 0 : index
    %c19 = arith.constant 19 : index
    %23 = vector.load %arg2[%c0_26, %c0_27, %c0_28, %c19] : memref<1x1x4x182xf32, #tpu.memory_space<vmem>>, vector<1x1x4x144xf32>
    %24 = vector.shape_cast %23 : vector<1x1x4x144xf32> to vector<4x144xf32>
    %c4 = arith.constant 4 : index
    %c0_29 = arith.constant 0 : index
    %c0_30 = arith.constant 0 : index
    %25 = vector.load %arg3[%c4, %c0_29, %c0_30] : memref<9x16x4xf32, #tpu.memory_space<vmem>>, vector<1x16x4xf32>
    %26 = vector.shape_cast %25 : vector<1x16x4xf32> to vector<16x4xf32>
    %cst_31 = arith.constant dense<0.000000e+00> : vector<16x144xf32>
    %27 = tpu.matmul %26, %24, %cst_31 {dimension_numbers = #tpu.dot_dimension_numbers<[1], [0], [0], [1], [0, 0, 1, 1], [], []>} : vector<16x4xf32>, vector<4x144xf32>, vector<16x144xf32> -> vector<16x144xf32>
    %28 = arith.addf %22, %27 : vector<16x144xf32>
    %c0_32 = arith.constant 0 : index
    %c0_33 = arith.constant 0 : index
    %c0_34 = arith.constant 0 : index
    %c20 = arith.constant 20 : index
    %29 = vector.load %arg2[%c0_32, %c0_33, %c0_34, %c20] : memref<1x1x4x182xf32, #tpu.memory_space<vmem>>, vector<1x1x4x144xf32>
    %30 = vector.shape_cast %29 : vector<1x1x4x144xf32> to vector<4x144xf32>
    %c5 = arith.constant 5 : index
    %c0_35 = arith.constant 0 : index
    %c0_36 = arith.constant 0 : index
    %31 = vector.load %arg3[%c5, %c0_35, %c0_36] : memref<9x16x4xf32, #tpu.memory_space<vmem>>, vector<1x16x4xf32>
    %32 = vector.shape_cast %31 : vector<1x16x4xf32> to vector<16x4xf32>
    %cst_37 = arith.constant dense<0.000000e+00> : vector<16x144xf32>
    %33 = tpu.matmul %32, %30, %cst_37 {dimension_numbers = #tpu.dot_dimension_numbers<[1], [0], [0], [1], [0, 0, 1, 1], [], []>} : vector<16x4xf32>, vector<4x144xf32>, vector<16x144xf32> -> vector<16x144xf32>
    %34 = arith.addf %28, %33 : vector<16x144xf32>
    %c0_38 = arith.constant 0 : index
    %c0_39 = arith.constant 0 : index
    %c0_40 = arith.constant 0 : index
    %c36 = arith.constant 36 : index
    %35 = vector.load %arg2[%c0_38, %c0_39, %c0_40, %c36] : memref<1x1x4x182xf32, #tpu.memory_space<vmem>>, vector<1x1x4x144xf32>
    %36 = vector.shape_cast %35 : vector<1x1x4x144xf32> to vector<4x144xf32>
    %c6 = arith.constant 6 : index
    %c0_41 = arith.constant 0 : index
    %c0_42 = arith.constant 0 : index
    %37 = vector.load %arg3[%c6, %c0_41, %c0_42] : memref<9x16x4xf32, #tpu.memory_space<vmem>>, vector<1x16x4xf32>
    %38 = vector.shape_cast %37 : vector<1x16x4xf32> to vector<16x4xf32>
    %cst_43 = arith.constant dense<0.000000e+00> : vector<16x144xf32>
    %39 = tpu.matmul %38, %36, %cst_43 {dimension_numbers = #tpu.dot_dimension_numbers<[1], [0], [0], [1], [0, 0, 1, 1], [], []>} : vector<16x4xf32>, vector<4x144xf32>, vector<16x144xf32> -> vector<16x144xf32>
    %40 = arith.addf %34, %39 : vector<16x144xf32>
    %c0_44 = arith.constant 0 : index
    %c0_45 = arith.constant 0 : index
    %c0_46 = arith.constant 0 : index
    %c37 = arith.constant 37 : index
    %41 = vector.load %arg2[%c0_44, %c0_45, %c0_46, %c37] : memref<1x1x4x182xf32, #tpu.memory_space<vmem>>, vector<1x1x4x144xf32>
    %42 = vector.shape_cast %41 : vector<1x1x4x144xf32> to vector<4x144xf32>
    %c7 = arith.constant 7 : index
    %c0_47 = arith.constant 0 : index
    %c0_48 = arith.constant 0 : index
    %43 = vector.load %arg3[%c7, %c0_47, %c0_48] : memref<9x16x4xf32, #tpu.memory_space<vmem>>, vector<1x16x4xf32>
    %44 = vector.shape_cast %43 : vector<1x16x4xf32> to vector<16x4xf32>
    %cst_49 = arith.constant dense<0.000000e+00> : vector<16x144xf32>
    %45 = tpu.matmul %44, %42, %cst_49 {dimension_numbers = #tpu.dot_dimension_numbers<[1], [0], [0], [1], [0, 0, 1, 1], [], []>} : vector<16x4xf32>, vector<4x144xf32>, vector<16x144xf32> -> vector<16x144xf32>
    %46 = arith.addf %40, %45 : vector<16x144xf32>
    %c0_50 = arith.constant 0 : index
    %c0_51 = arith.constant 0 : index
    %c0_52 = arith.constant 0 : index
    %c38 = arith.constant 38 : index
    %47 = vector.load %arg2[%c0_50, %c0_51, %c0_52, %c38] : memref<1x1x4x182xf32, #tpu.memory_space<vmem>>, vector<1x1x4x144xf32>
    %48 = vector.shape_cast %47 : vector<1x1x4x144xf32> to vector<4x144xf32>
    %c8 = arith.constant 8 : index
    %c0_53 = arith.constant 0 : index
    %c0_54 = arith.constant 0 : index
    %49 = vector.load %arg3[%c8, %c0_53, %c0_54] : memref<9x16x4xf32, #tpu.memory_space<vmem>>, vector<1x16x4xf32>
    %50 = vector.shape_cast %49 : vector<1x16x4xf32> to vector<16x4xf32>
    %cst_55 = arith.constant dense<0.000000e+00> : vector<16x144xf32>
    %51 = tpu.matmul %50, %48, %cst_55 {dimension_numbers = #tpu.dot_dimension_numbers<[1], [0], [0], [1], [0, 0, 1, 1], [], []>} : vector<16x4xf32>, vector<4x144xf32>, vector<16x144xf32> -> vector<16x144xf32>
    %52 = arith.addf %46, %51 : vector<16x144xf32>
    %c0_56 = arith.constant 0 : index
    %c0_57 = arith.constant 0 : index
    %53 = vector.load %arg4[%c0_56, %c0_57] : memref<16x1xf32, #tpu.memory_space<vmem>>, vector<16x1xf32>
    %54 = vector.broadcast %53 : vector<16x1xf32> to vector<16x144xf32>
    %55 = arith.addf %52, %54 : vector<16x144xf32>
    %c0_58 = arith.constant 0 : index
    %56 = memref.load %arg5[%c0_58] : memref<1xf32, #tpu.memory_space<smem>>
    %cst_59 = arith.constant 0.000000e+00 : f32
    %57 = vector.broadcast %cst_59 : f32 to vector<16x144xf32>
    %58 = arith.cmpf oge, %55, %57 : vector<16x144xf32>
    %59 = vector.broadcast %56 : f32 to vector<16x144xf32>
    %60 = arith.mulf %59, %55 : vector<16x144xf32>
    %61 = arith.select %58, %55, %60 : vector<16x144xi1>, vector<16x144xf32>
    %c0_60 = arith.constant 0 : index
    %c0_61 = arith.constant 0 : index
    %c0_62 = arith.constant 0 : index
    %c0_63 = arith.constant 0 : index
    %62 = vector.load %arg6[%c0_60, %c0_61, %c0_62, %c0_63] : memref<1x1x16x144xf32, #tpu.memory_space<vmem>>, vector<1x1x16x144xf32>
    %63 = vector.shape_cast %62 : vector<1x1x16x144xf32> to vector<16x144xf32>
    %64 = vector.shape_cast %61 : vector<16x144xf32> to vector<1x1x16x144xf32>
    tpu.vector_store %arg6[%c0_60, %c0_61, %c0_62, %c0_63], %64 {strides = array<i32>} : memref<1x1x16x144xf32, #tpu.memory_space<vmem>>, vector<1x1x16x144xf32>,
    return
  }
  func.func @transform_0(%arg0: i32, %arg1: i32) -> (i32, i32, i32, i32) {
    %c0_i32 = arith.constant 0 : i32
    %c0_i32_0 = arith.constant 0 : i32
    %c0_i32_1 = arith.constant 0 : i32
    return %arg0, %arg1, %c0_i32, %c0_i32_0 : i32, i32, i32, i32
  }
  func.func @transform_1(%arg0: i32, %arg1: i32) -> (i32, i32, i32) {
    %c0_i32 = arith.constant 0 : i32
    %c0_i32_0 = arith.constant 0 : i32
    %c0_i32_1 = arith.constant 0 : i32
    %c0_i32_2 = arith.constant 0 : i32
    return %c0_i32, %c0_i32_0, %c0_i32_1 : i32, i32, i32
  }
  func.func @transform_2(%arg0: i32, %arg1: i32) -> (i32, i32) {
    %c0_i32 = arith.constant 0 : i32
    %c0_i32_0 = arith.constant 0 : i32
    %c0_i32_1 = arith.constant 0 : i32
    return %c0_i32, %c0_i32_0 : i32, i32
  }
  func.func @transform_3(%arg0: i32, %arg1: i32) -> i32 {
    %c0_i32 = arith.constant 0 : i32
    %c0_i32_0 = arith.constant 0 : i32
    return %c0_i32 : i32
  }
  func.func @transform_4(%arg0: i32, %arg1: i32) -> (i32, i32, i32, i32) {
    %c0_i32 = arith.constant 0 : i32
    %c0_i32_0 = arith.constant 0 : i32
    %c0_i32_1 = arith.constant 0 : i32
    return %arg0, %arg1, %c0_i32, %c0_i32_0 : i32, i32, i32, i32
  }
}

</mosaic_0001>

<llo_original>
// kernel: tpu_custom_call.1
$region0: #{tpu_custom_call.1}
  #allocation0 [shape = 'u32[]', space=smem, size = 0x4, offset = 0x4, fixed_abs, tag = 'smem constant byte address 0x4 - core index']
  #allocation1 [shape = 'u32[72,128]{1,0:T(1,128)}', space=vmem, size = 0x9000, scoped, tag = 'internal scratch']
  #allocation2 [shape = 'f32[1]{0:T(128)S(6)}', space=smem, size = 0x200, scoped, tag = 'scoped memory for tpu_custom_call.1']
  %s0 = inlined_call_operand.vmem [shape: f32[2,2,4,182], index: 0, kind: input, shape index: {}]
  %s1 = inlined_call_operand.vmem [shape: f32[9,16,4], index: 1, kind: input, shape index: {}]
  %s2 = inlined_call_operand.vmem [shape: f32[16,1], index: 2, kind: input, shape index: {}]
  %s3 = inlined_call_operand.<no memory space> [shape: f32[1], index: 3, kind: input, shape index: {}]
  %s4 = inlined_call_operand.hbm [shape: f32[2,2,16,144], index: 4, kind: output, shape index: {}]
  %s5 = sld [smem:[#allocation0]]
  $region49: #{tpu_custom_call.1} parent=0
    _
  %s7 = ssub.s32 1, %s5
  %s8 = scalar_select 0, %s7, %s5
  %9 = sst [smem:[#allocation2]] %s3
  $region1: #{tpu_custom_call.1} parent=0
    #allocation3 [shape = 'u8[32768]{0}', space=vmem, size = 0x8000, scoped, tag = 'output window, operand 0']
    #allocation4 [shape = 's32[2]{0}', space=sflag, size = 0x8, scoped, tag = 'scoped memory for tpu_custom_call.1']
    %10 = vsyncpa [#allocation4], 0
    %s11 = scalar_lea.sflag [#allocation4], 1
    %12 = vsyncpa %s11, 0
    loop: start=0, step=1, limit=6
    $region2: #{tpu_custom_call.1} parent=1 // loop_pre_header
      _
    $region3: #{tpu_custom_call.1} parent=1 // loop_header
      %s14 = sphi 0, %s18
      %p15 = scmp.ge.s32.totalorder %s14, 6
      %s21 = sphi 0, %s33
      %s22 = sphi 0, %s29
      %s23 = sphi 0, %s21
      %s24 = sphi 0, %s22
      %s25 = sphi 0, %s23
      %s26 = sphi 0, %s24
      %s38 = sphi 0, %s40
      %s41 = sphi 0, %s38
      %s42 = sphi 0, %s41
      %s58 = sphi 0, %s42
      %s62 = sphi 0, %s62
      %s64 = sphi 0, %s62
      %s65 = sphi 0, %s64
      %s79 = sphi 0, %s65
      %s83 = sphi 0, %s83
      %s85 = sphi 0, %s83
      %s86 = sphi 0, %s85
      %s100 = sphi 0, %s86
      %s104 = sphi 0, %s104
      %s106 = sphi 0, %s104
      %s107 = sphi 0, %s106
      %s121 = sphi 0, %s107
      %s129 = sphi 0, %s131
      %s132 = sphi 0, %s129
      %s133 = sphi 0, %s132
      %s149 = sphi 0, %s133
    $region4: #{tpu_custom_call.1} parent=1 // loop_header_branch
      %17 = sbr.rel (%p15) target = $region8
    $region5: #{tpu_custom_call.1} parent=1 // loop_body
      %s19 = ssub.s32 %s14, 1
      %s20 = ssub.s32 %s14, 2
      %s27 = sadd.s32 1, %s22
      %p28 = scmp.ge.s32.totalorder %s27, 2
      %s29 = scalar_select %p28, 0, %s27
      %s30 = sadd.s32 1, %s21
      %s31 = scalar_select %p28, %s30, %s21
      %p32 = scmp.ge.s32.totalorder %s31, 2
      %s33 = scalar_select %p32, 0, %s31
      %s34 = ssub.s32 %s21, %s33
      %s35 = ssub.s32 %s22, %s29
      %s36 = sor.u32 %s34, %s35
      %p37 = scmp.eq.s32.totalorder %s36, 0
      %s39 = sadd.s32 %s38, 1
      %s40 = scalar_select %p37, %s38, %s39
      %p43 = pneg %p37
      %p44 = scmp.eq.s32.totalorder %s14, 3
      %p45 = por %p43, %p44
      %p46 = scmp.ne.s32.totalorder %s38, %s41
      %p47 = scmp.eq.s32.totalorder %s14, 0
      %p48 = por %p46, %p47
      %p49 = scmp.ne.s32.totalorder %s38, %s41
      %p50 = scmp.eq.s32.totalorder %s19, 3
      %p51 = por %p49, %p50
      %p52 = scmp.ne.s32.totalorder %s41, %s42
      %p53 = scmp.eq.s32.totalorder %s19, 0
      %p54 = por %p52, %p53
      %p55 = scmp.ne.s32.totalorder %s41, %s42
      %p56 = scmp.eq.s32.totalorder %s20, 3
      %p57 = por %p55, %p56
      %p59 = scmp.ne.s32.totalorder %s42, %s58
      %p60 = scmp.eq.s32.totalorder %s20, 0
      %p61 = por %p59, %p60
      %s63 = sadd.s32 %s62, 1
      %p66 = scmp.eq.s32.totalorder %s14, 3
      %p67 = scmp.ne.s32.totalorder %s62, %s64
      %p68 = scmp.eq.s32.totalorder %s14, 0
      %p69 = por %p67, %p68
      %p70 = scmp.ne.s32.totalorder %s62, %s64
      %p71 = scmp.eq.s32.totalorder %s19, 3
      %p72 = por %p70, %p71
      %p73 = scmp.ne.s32.totalorder %s64, %s65
      %p74 = scmp.eq.s32.totalorder %s19, 0
      %p75 = por %p73, %p74
      %p76 = scmp.ne.s32.totalorder %s64, %s65
      %p77 = scmp.eq.s32.totalorder %s20, 3
      %p78 = por %p76, %p77
      %p80 = scmp.ne.s32.totalorder %s65, %s79
      %p81 = scmp.eq.s32.totalorder %s20, 0
      %p82 = por %p80, %p81
      %s84 = sadd.s32 %s83, 1
      %p87 = scmp.eq.s32.totalorder %s14, 3
      %p88 = scmp.ne.s32.totalorder %s83, %s85
      %p89 = scmp.eq.s32.totalorder %s14, 0
      %p90 = por %p88, %p89
      %p91 = scmp.ne.s32.totalorder %s83, %s85
      %p92 = scmp.eq.s32.totalorder %s19, 3
      %p93 = por %p91, %p92
      %p94 = scmp.ne.s32.totalorder %s85, %s86
      %p95 = scmp.eq.s32.totalorder %s19, 0
      %p96 = por %p94, %p95
      %p97 = scmp.ne.s32.totalorder %s85, %s86
      %p98 = scmp.eq.s32.totalorder %s20, 3
      %p99 = por %p97, %p98
      %p101 = scmp.ne.s32.totalorder %s86, %s100
      %p102 = scmp.eq.s32.totalorder %s20, 0
      %p103 = por %p101, %p102
      %s105 = sadd.s32 %s104, 1
      %p108 = scmp.eq.s32.totalorder %s14, 3
      %p109 = scmp.ne.s32.totalorder %s104, %s106
      %p110 = scmp.eq.s32.totalorder %s14, 0
      %p111 = por %p109, %p110
      %p112 = scmp.ne.s32.totalorder %s104, %s106
      %p113 = scmp.eq.s32.totalorder %s19, 3
      %p114 = por %p112, %p113
      %p115 = scmp.ne.s32.totalorder %s106, %s107
      %p116 = scmp.eq.s32.totalorder %s19, 0
      %p117 = por %p115, %p116
      %p118 = scmp.ne.s32.totalorder %s106, %s107
      %p119 = scmp.eq.s32.totalorder %s20, 3
      %p120 = por %p118, %p119
      %p122 = scmp.ne.s32.totalorder %s107, %s121
      %p123 = scmp.eq.s32.totalorder %s20, 0
      %p124 = por %p122, %p123
      %s125 = ssub.s32 %s21, %s33
      %s126 = ssub.s32 %s22, %s29
      %s127 = sor.u32 %s125, %s126
      %p128 = scmp.eq.s32.totalorder %s127, 0
      %s130 = sadd.s32 %s129, 1
      %s131 = scalar_select %p128, %s129, %s130
      %p134 = pneg %p128
      %p135 = scmp.eq.s32.totalorder %s14, 3
      %p136 = por %p134, %p135
      %p137 = scmp.ne.s32.totalorder %s129, %s132
      %p138 = scmp.eq.s32.totalorder %s14, 0
      %p139 = por %p137, %p138
      %p140 = scmp.ne.s32.totalorder %s129, %s132
      %p141 = scmp.eq.s32.totalorder %s19, 3
      %p142 = por %p140, %p141
      %p143 = scmp.ne.s32.totalorder %s132, %s133
      %p144 = scmp.eq.s32.totalorder %s19, 0
      %p145 = por %p143, %p144
      %p146 = scmp.ne.s32.totalorder %s132, %s133
      %p147 = scmp.eq.s32.totalorder %s20, 3
      %p148 = por %p146, %p147
      %p150 = scmp.ne.s32.totalorder %s133, %s149
      %p151 = scmp.eq.s32.totalorder %s20, 0
      %p152 = por %p150, %p151
      %p153 = scmp.le.s32.totalorder 1, %s14
      %p154 = scmp.lt.s32.totalorder %s14, 5
      %p155 = pnand %p153, %p154
      %p156 = pneg %p155
      // Predicated region
      $region9: #{tpu_custom_call.1} parent=5 // pred_check
        _
      $region10: #{tpu_custom_call.1} parent=5 // pred_check_branch
        %158 = sbr.rel (%p155) target = $region12
      $region11: #{tpu_custom_call.1} parent=5 // pred_region
        %s159 = ssub.s32 %s14, 1
        // Predicated region
        $region13: #{tpu_custom_call.1} parent=11 // pred_check
          %p160 = pneg %p75
        $region14: #{tpu_custom_call.1} parent=11 // pred_check_branch
          %162 = sbr.rel (%p160) target = $region16
        $region15: #{tpu_custom_call.1} parent=11 // pred_region
          _
        $region16: #{tpu_custom_call.1} parent=11 // pred_fallthru
          _
        // Predicated region
        $region17: #{tpu_custom_call.1} parent=11 // pred_check
          %p163 = pneg %p96
        $region18: #{tpu_custom_call.1} parent=11 // pred_check_branch
          %165 = sbr.rel (%p163) target = $region20
        $region19: #{tpu_custom_call.1} parent=11 // pred_region
          _
        $region20: #{tpu_custom_call.1} parent=11 // pred_fallthru
          _
        // Predicated region
        $region21: #{tpu_custom_call.1} parent=11 // pred_check
          %p166 = pneg %p117
        $region22: #{tpu_custom_call.1} parent=11 // pred_check_branch
          %168 = sbr.rel (%p166) target = $region24
        $region23: #{tpu_custom_call.1} parent=11 // pred_region
          _
        $region24: #{tpu_custom_call.1} parent=11 // pred_fallthru
          _
      $region12: #{tpu_custom_call.1} parent=5 // pred_fallthru
        _
      %p169 = scmp.lt.s32.totalorder %s14, 4
      // Predicated region
      $region25: #{tpu_custom_call.1} parent=5 // pred_check
        %p170 = pneg %p169
      $region26: #{tpu_custom_call.1} parent=5 // pred_check_branch
        %172 = sbr.rel (%p170) target = $region28
      $region27: #{tpu_custom_call.1} parent=5 // pred_region
        // Predicated region
        $region29: #{tpu_custom_call.1} parent=27 // pred_check
          %p173 = pneg %p48
        $region30: #{tpu_custom_call.1} parent=27 // pred_check_branch
          %175 = sbr.rel (%p173) target = $region32
        $region31: #{tpu_custom_call.1} parent=27 // pred_region
          %p176 = scmp.lt.s32.totalorder %s21, 1
          %s177 = scalar_select %p176, %s21, 1
          %p178 = scmp.lt.s32.totalorder %s22, 1
          %s179 = scalar_select %p178, %s22, 1
          %s180 = smul.addr %s179, 2
          %s181 = smul.addr %s177, 4
          %s182 = sadd.s32 %s180, %s181
          %s183 = smul.addr %s182, 4
          %s184 = scalar_lea.vmem %s0, %s183
        $region32: #{tpu_custom_call.1} parent=27 // pred_fallthru
          _
      $region28: #{tpu_custom_call.1} parent=5 // pred_fallthru
        _
      %p185 = scmp.le.s32.totalorder 1, %s14
      %p186 = scmp.lt.s32.totalorder %s14, 5
      %p187 = pnand %p185, %p186
      %p188 = pneg %p187
      // Predicated region
      $region33: #{tpu_custom_call.1} parent=5 // pred_check
        _
      $region34: #{tpu_custom_call.1} parent=5 // pred_check_branch
        %190 = sbr.rel (%p187) target = $region36
      $region35: #{tpu_custom_call.1} parent=5 // pred_region
        %s191 = ssub.s32 %s14, 1
        %p192 = scmp.lt.s32.totalorder %s23, 1
        %s193 = scalar_select %p192, %s23, 1
        %p194 = scmp.lt.s32.totalorder %s24, 1
        %s195 = scalar_select %p194, %s24, 1
        %s196 = smul.addr %s195, 2
        %s197 = smul.addr %s193, 4
        %s198 = sadd.s32 %s196, %s197
        %s199 = smul.addr %s198, 4
        %s200 = scalar_lea.vmem %s0, %s199
        %p201 = pneg %p54
        %p202 = pneg %p51
        %p203 = pneg %p75
        %p204 = pneg %p72
        %p205 = pneg %p96
        %p206 = pneg %p93
        %p207 = pneg %p117
        %p208 = pneg %p114
        %p209 = pneg %p145
        %p210 = pneg %p142
        %s211 = sand.u32 %s132, 1
        %s212 = scalar_lea.sflag [#allocation4], %s211
        %s213 = sand.u32 %s132, 1
        %s214 = smul.addr %s213, 32
        %s215 = scalar_lea.vmem [#allocation3], %s214
        %p216 = scmp.lt.s32.totalorder %s23, 1
        %s217 = scalar_select %p216, %s23, 1
        %p218 = scmp.lt.s32.totalorder %s24, 1
        %s219 = scalar_select %p218, %s24, 1
        %s220 = smul.addr %s219, 2
        %s221 = smul.addr %s217, 4
        %s222 = sadd.s32 %s220, %s221
        %s223 = smul.addr %s222, 4
        %s224 = scalar_lea.vmem %s0, %s223
        %v225 = vld [vmem:[%s224] sm:$0xff]
        %v226 = vld [vmem:[%s1] sm:$0xff]
        %v227 = vld [vmem:[%s1 + $0x8] sm:$0xff]
        %s228 = scalar_lea.vmem %s1, 16
        %v229 = vld [vmem:[%s228] sm:$0xff]
        %v230 = vld [vmem:[%s228 + $0x8] sm:$0xff]
        %232 = vst [vmem:[#allocation1] ss:$2 sm:$0xff] %v225
        %v233 = vld.sshfl [vmem:[#allocation1] sm:$0xff pattern:$0x75316420]
        %v234 = vld.sshfl [vmem:[#allocation1 + $0x8] sm:$0xff pattern:$0x75316420]
        %235 = vrot.lane.b32.xlu0 %v233, 127
        %v236 = vpop.permute.xlu0 %235
        %237 = vrot.lane.b32.xlu0 %v234, 127
        %v238 = vpop.permute.xlu0 %237
        %vm239 = vcmask 1039360
        %v240 = vsel %vm239, %v236, %v238
        %vm241 = vcmask 31744
        %v243 = vsel %vm241, %v229, 0
        %v246 = vsel %vm241, %v230, 0
        %vm248 = vcmask 1043456
        %v249 = vsel %vm248, %v240, 0
        %v251 = vsel %vm248, %v238, 0
        %253 = vmatpush.msra.mxu0 0.0
        %254 = vmatpush.msra.mxu0 0.0
        %255 = vmatpush.msra.mxu0 0.0
        %256 = vmatpush.msra.mxu0 0.0
        %257 = vmatpush.msra.mxu0 0.0
        %258 = vmatpush.msra.mxu0 0.0
        %259 = vmatpush.msra.mxu0 0.0
        %260 = vmatpush.msra.mxu0 0.0
        %261 = vmatpush.msra.mxu0 0.0
        %262 = vmatpush.msra.mxu0 0.0
        %263 = vmatpush.msra.mxu0 0.0
        %264 = vmatpush.msra.mxu0 0.0
        %265 = vmatpush.msra.mxu0 0.0
        %266 = vmatpush.msra.mxu0 0.0
        %267 = vmatpush.msra.mxu0 0.0
        %268 = vmatpush.msra.mxu0 %v249
        %269 = vmatmul.f32.gmra.mxu0 %v243
        %v270 = vpop.f32.mrf.mxu0
        %v271 = vadd.f32 0.0, %v270
        %272 = vmatmul.f32.gmra.mxu0 %v246
        %v273 = vpop.f32.mrf.mxu0
        %v274 = vadd.f32 0.0, %v273
        %275 = vdwg.mxu0
        %276 = vmatpush.msra.mxu0 0.0
        %277 = vmatpush.msra.mxu0 0.0
        %278 = vmatpush.msra.mxu0 0.0
        %279 = vmatpush.msra.mxu0 0.0
        %280 = vmatpush.msra.mxu0 0.0
        %281 = vmatpush.msra.mxu0 0.0
        %282 = vmatpush.msra.mxu0 0.0
        %283 = vmatpush.msra.mxu0 0.0
        %284 = vmatpush.msra.mxu0 0.0
        %285 = vmatpush.msra.mxu0 0.0
        %286 = vmatpush.msra.mxu0 0.0
        %287 = vmatpush.msra.mxu0 0.0
        %288 = vmatpush.msra.mxu0 0.0
        %289 = vmatpush.msra.mxu0 0.0
        %290 = vmatpush.msra.mxu0 0.0
        %291 = vmatpush.msra.mxu0 %v251
        %292 = vmatmul.f32.gmra.mxu0 %v243
        %v293 = vpop.f32.mrf.mxu0
        %v294 = vadd.f32 0.0, %v293
        %295 = vmatmul.f32.gmra.mxu0 %v246
        %v296 = vpop.f32.mrf.mxu0
        %v297 = vadd.f32 0.0, %v296
        %298 = vdwg.mxu0
        %299 = vst [vmem:[#allocation1] ss:$2 sm:$0xff] %v225
        %v300 = vld.sshfl [vmem:[#allocation1] sm:$0xff pattern:$0x75316420]
        %v301 = vld.sshfl [vmem:[#allocation1 + $0x8] sm:$0xff pattern:$0x75316420]
        %v303 = vsel %vm241, %v226, 0
        %v306 = vsel %vm241, %v227, 0
        %v308 = vsel %vm248, %v300, 0
        %v310 = vsel %vm248, %v301, 0
        %312 = vmatpush.msra.mxu0 0.0
        %313 = vmatpush.msra.mxu0 0.0
        %314 = vmatpush.msra.mxu0 0.0
        %315 = vmatpush.msra.mxu0 0.0
        %316 = vmatpush.msra.mxu0 0.0
        %317 = vmatpush.msra.mxu0 0.0
        %318 = vmatpush.msra.mxu0 0.0
        %319 = vmatpush.msra.mxu0 0.0
        %320 = vmatpush.msra.mxu0 0.0
        %321 = vmatpush.msra.mxu0 0.0
        %322 = vmatpush.msra.mxu0 0.0
        %323 = vmatpush.msra.mxu0 0.0
        %324 = vmatpush.msra.mxu0 0.0
        %325 = vmatpush.msra.mxu0 0.0
        %326 = vmatpush.msra.mxu0 0.0
        %327 = vmatpush.msra.mxu0 %v308
        %328 = vmatmul.f32.gmra.mxu0 %v303
        %v329 = vpop.f32.mrf.mxu0
        %v330 = vadd.f32 %v271, %v329
        %331 = vmatmul.f32.gmra.mxu0 %v306
        %v332 = vpop.f32.mrf.mxu0
        %v333 = vadd.f32 %v274, %v332
        %334 = vdwg.mxu0
        %335 = vmatpush.msra.mxu0 0.0
        %336 = vmatpush.msra.mxu0 0.0
        %337 = vmatpush.msra.mxu0 0.0
        %338 = vmatpush.msra.mxu0 0.0
        %339 = vmatpush.msra.mxu0 0.0
        %340 = vmatpush.msra.mxu0 0.0
        %341 = vmatpush.msra.mxu0 0.0
        %342 = vmatpush.msra.mxu0 0.0
        %343 = vmatpush.msra.mxu0 0.0
        %344 = vmatpush.msra.mxu0 0.0
        %345 = vmatpush.msra.mxu0 0.0
        %346 = vmatpush.msra.mxu0 0.0
        %347 = vmatpush.msra.mxu0 0.0
        %348 = vmatpush.msra.mxu0 0.0
        %349 = vmatpush.msra.mxu0 0.0
        %350 = vmatpush.msra.mxu0 %v310
        %351 = vmatmul.f32.gmra.mxu0 %v303
        %v352 = vpop.f32.mrf.mxu0
        %v353 = vadd.f32 %v294, %v352
        %354 = vmatmul.f32.gmra.mxu0 %v306
        %v355 = vpop.f32.mrf.mxu0
        %v356 = vadd.f32 %v297, %v355
        %357 = vdwg.mxu0
        %v358 = vld [vmem:[%s224] sm:$0xff]
        %s359 = scalar_lea.vmem %s1, 32
        %v360 = vld [vmem:[%s359] sm:$0xff]
        %v361 = vld [vmem:[%s359 + $0x8] sm:$0xff]
        %363 = vst [vmem:[#allocation1] ss:$2 sm:$0xff] %v358
        %v364 = vld.sshfl [vmem:[#allocation1] sm:$0xff pattern:$0x75316420]
        %v365 = vld.sshfl [vmem:[#allocation1 + $0x8] sm:$0xff pattern:$0x75316420]
        %366 = vrot.lane.b32.xlu0 %v364, 126
        %v367 = vpop.permute.xlu0 %366
        %368 = vrot.lane.b32.xlu0 %v365, 126
        %v369 = vpop.permute.xlu0 %368
        %vm370 = vcmask 1031168
        %v371 = vsel %vm370, %v367, %v369
        %v373 = vsel %vm241, %v360, 0
        %v376 = vsel %vm241, %v361, 0
        %v378 = vsel %vm248, %v371, 0
        %v380 = vsel %vm248, %v369, 0
        %382 = vmatpush.msra.mxu0 0.0
        %383 = vmatpush.msra.mxu0 0.0
        %384 = vmatpush.msra.mxu0 0.0
        %385 = vmatpush.msra.mxu0 0.0
        %386 = vmatpush.msra.mxu0 0.0
        %387 = vmatpush.msra.mxu0 0.0
        %388 = vmatpush.msra.mxu0 0.0
        %389 = vmatpush.msra.mxu0 0.0
        %390 = vmatpush.msra.mxu0 0.0
        %391 = vmatpush.msra.mxu0 0.0
        %392 = vmatpush.msra.mxu0 0.0
        %393 = vmatpush.msra.mxu0 0.0
        %394 = vmatpush.msra.mxu0 0.0
        %395 = vmatpush.msra.mxu0 0.0
        %396 = vmatpush.msra.mxu0 0.0
        %397 = vmatpush.msra.mxu0 %v378
        %398 = vmatmul.f32.gmra.mxu0 %v373
        %v399 = vpop.f32.mrf.mxu0
        %v400 = vadd.f32 0.0, %v399
        %401 = vmatmul.f32.gmra.mxu0 %v376
        %v402 = vpop.f32.mrf.mxu0
        %v403 = vadd.f32 0.0, %v402
        %404 = vdwg.mxu0
        %405 = vmatpush.msra.mxu0 0.0
        %406 = vmatpush.msra.mxu0 0.0
        %407 = vmatpush.msra.mxu0 0.0
        %408 = vmatpush.msra.mxu0 0.0
        %409 = vmatpush.msra.mxu0 0.0
        %410 = vmatpush.msra.mxu0 0.0
        %411 = vmatpush.msra.mxu0 0.0
        %412 = vmatpush.msra.mxu0 0.0
        %413 = vmatpush.msra.mxu0 0.0
        %414 = vmatpush.msra.mxu0 0.0
        %415 = vmatpush.msra.mxu0 0.0
        %416 = vmatpush.msra.mxu0 0.0
        %417 = vmatpush.msra.mxu0 0.0
        %418 = vmatpush.msra.mxu0 0.0
        %419 = vmatpush.msra.mxu0 0.0
        %420 = vmatpush.msra.mxu0 %v380
        %421 = vmatmul.f32.gmra.mxu0 %v373
        %v422 = vpop.f32.mrf.mxu0
        %v423 = vadd.f32 0.0, %v422
        %424 = vmatmul.f32.gmra.mxu0 %v376
        %v425 = vpop.f32.mrf.mxu0
        %v426 = vadd.f32 0.0, %v425
        %427 = vdwg.mxu0
        %v428 = vadd.f32 %v330, %v400
        %v429 = vadd.f32 %v353, %v423
        %v430 = vadd.f32 %v333, %v403
        %v431 = vadd.f32 %v356, %v426
        %v432 = vld [vmem:[%s224] sm:$0xff]
        %s433 = scalar_lea.vmem %s1, 48
        %v434 = vld [vmem:[%s433] sm:$0xff]
        %v435 = vld [vmem:[%s433 + $0x8] sm:$0xff]
        %437 = vst [vmem:[#allocation1] ss:$2 sm:$0xff] %v432
        %v438 = vld.sshfl [vmem:[#allocation1] sm:$0xff pattern:$0x75316420]
        %v439 = vld.sshfl [vmem:[#allocation1 + $0x8] sm:$0xff pattern:$0x75316420]
        %440 = vrot.lane.b32.xlu0 %v438, 110
        %v441 = vpop.permute.xlu0 %440
        %442 = vrot.lane.b32.xlu0 %v439, 110
        %v443 = vpop.permute.xlu0 %442
        %vm444 = vcmask 900096
        %v445 = vsel %vm444, %v441, %v443
        %v447 = vsel %vm241, %v434, 0
        %v450 = vsel %vm241, %v435, 0
        %v452 = vsel %vm248, %v445, 0
        %v454 = vsel %vm248, %v443, 0
        %456 = vmatpush.msra.mxu0 0.0
        %457 = vmatpush.msra.mxu0 0.0
        %458 = vmatpush.msra.mxu0 0.0
        %459 = vmatpush.msra.mxu0 0.0
        %460 = vmatpush.msra.mxu0 0.0
        %461 = vmatpush.msra.mxu0 0.0
        %462 = vmatpush.msra.mxu0 0.0
        %463 = vmatpush.msra.mxu0 0.0
        %464 = vmatpush.msra.mxu0 0.0
        %465 = vmatpush.msra.mxu0 0.0
        %466 = vmatpush.msra.mxu0 0.0
        %467 = vmatpush.msra.mxu0 0.0
        %468 = vmatpush.msra.mxu0 0.0
        %469 = vmatpush.msra.mxu0 0.0
        %470 = vmatpush.msra.mxu0 0.0
        %471 = vmatpush.msra.mxu0 %v452
        %472 = vmatmul.f32.gmra.mxu0 %v447
        %v473 = vpop.f32.mrf.mxu0
        %v474 = vadd.f32 0.0, %v473
        %475 = vmatmul.f32.gmra.mxu0 %v450
        %v476 = vpop.f32.mrf.mxu0
        %v477 = vadd.f32 0.0, %v476
        %478 = vdwg.mxu0
        %479 = vmatpush.msra.mxu0 0.0
        %480 = vmatpush.msra.mxu0 0.0
        %481 = vmatpush.msra.mxu0 0.0
        %482 = vmatpush.msra.mxu0 0.0
        %483 = vmatpush.msra.mxu0 0.0
        %484 = vmatpush.msra.mxu0 0.0
        %485 = vmatpush.msra.mxu0 0.0
        %486 = vmatpush.msra.mxu0 0.0
        %487 = vmatpush.msra.mxu0 0.0
        %488 = vmatpush.msra.mxu0 0.0
        %489 = vmatpush.msra.mxu0 0.0
        %490 = vmatpush.msra.mxu0 0.0
        %491 = vmatpush.msra.mxu0 0.0
        %492 = vmatpush.msra.mxu0 0.0
        %493 = vmatpush.msra.mxu0 0.0
        %494 = vmatpush.msra.mxu0 %v454
        %495 = vmatmul.f32.gmra.mxu0 %v447
        %v496 = vpop.f32.mrf.mxu0
        %v497 = vadd.f32 0.0, %v496
        %498 = vmatmul.f32.gmra.mxu0 %v450
        %v499 = vpop.f32.mrf.mxu0
        %v500 = vadd.f32 0.0, %v499
        %501 = vdwg.mxu0
        %v502 = vadd.f32 %v428, %v474
        %v503 = vadd.f32 %v429, %v497
        %v504 = vadd.f32 %v430, %v477
        %v505 = vadd.f32 %v431, %v500
        %v506 = vld [vmem:[%s224] sm:$0xff]
        %s507 = scalar_lea.vmem %s1, 64
        %v508 = vld [vmem:[%s507] sm:$0xff]
        %v509 = vld [vmem:[%s507 + $0x8] sm:$0xff]
        %511 = vst [vmem:[#allocation1] ss:$2 sm:$0xff] %v506
        %v512 = vld.sshfl [vmem:[#allocation1] sm:$0xff pattern:$0x75316420]
        %v513 = vld.sshfl [vmem:[#allocation1 + $0x8] sm:$0xff pattern:$0x75316420]
        %514 = vrot.lane.b32.xlu0 %v512, 109
        %v515 = vpop.permute.xlu0 %514
        %516 = vrot.lane.b32.xlu0 %v513, 109
        %v517 = vpop.permute.xlu0 %516
        %vm518 = vcmask 891904
        %v519 = vsel %vm518, %v515, %v517
        %v521 = vsel %vm241, %v508, 0
        %v524 = vsel %vm241, %v509, 0
        %v526 = vsel %vm248, %v519, 0
        %v528 = vsel %vm248, %v517, 0
        %530 = vmatpush.msra.mxu0 0.0
        %531 = vmatpush.msra.mxu0 0.0
        %532 = vmatpush.msra.mxu0 0.0
        %533 = vmatpush.msra.mxu0 0.0
        %534 = vmatpush.msra.mxu0 0.0
        %535 = vmatpush.msra.mxu0 0.0
        %536 = vmatpush.msra.mxu0 0.0
        %537 = vmatpush.msra.mxu0 0.0
        %538 = vmatpush.msra.mxu0 0.0
        %539 = vmatpush.msra.mxu0 0.0
        %540 = vmatpush.msra.mxu0 0.0
        %541 = vmatpush.msra.mxu0 0.0
        %542 = vmatpush.msra.mxu0 0.0
        %543 = vmatpush.msra.mxu0 0.0
        %544 = vmatpush.msra.mxu0 0.0
        %545 = vmatpush.msra.mxu0 %v526
        %546 = vmatmul.f32.gmra.mxu0 %v521
        %v547 = vpop.f32.mrf.mxu0
        %v548 = vadd.f32 0.0, %v547
        %549 = vmatmul.f32.gmra.mxu0 %v524
        %v550 = vpop.f32.mrf.mxu0
        %v551 = vadd.f32 0.0, %v550
        %552 = vdwg.mxu0
        %553 = vmatpush.msra.mxu0 0.0
        %554 = vmatpush.msra.mxu0 0.0
        %555 = vmatpush.msra.mxu0 0.0
        %556 = vmatpush.msra.mxu0 0.0
        %557 = vmatpush.msra.mxu0 0.0
        %558 = vmatpush.msra.mxu0 0.0
        %559 = vmatpush.msra.mxu0 0.0
        %560 = vmatpush.msra.mxu0 0.0
        %561 = vmatpush.msra.mxu0 0.0
        %562 = vmatpush.msra.mxu0 0.0
        %563 = vmatpush.msra.mxu0 0.0
        %564 = vmatpush.msra.mxu0 0.0
        %565 = vmatpush.msra.mxu0 0.0
        %566 = vmatpush.msra.mxu0 0.0
        %567 = vmatpush.msra.mxu0 0.0
        %568 = vmatpush.msra.mxu0 %v528
        %569 = vmatmul.f32.gmra.mxu0 %v521
        %v570 = vpop.f32.mrf.mxu0
        %v571 = vadd.f32 0.0, %v570
        %572 = vmatmul.f32.gmra.mxu0 %v524
        %v573 = vpop.f32.mrf.mxu0
        %v574 = vadd.f32 0.0, %v573
        %575 = vdwg.mxu0
        %v576 = vadd.f32 %v502, %v548
        %v577 = vadd.f32 %v503, %v571
        %v578 = vadd.f32 %v504, %v551
        %v579 = vadd.f32 %v505, %v574
        %v580 = vld [vmem:[%s224] sm:$0xff]
        %s581 = scalar_lea.vmem %s1, 80
        %v582 = vld [vmem:[%s581] sm:$0xff]
        %v583 = vld [vmem:[%s581 + $0x8] sm:$0xff]
        %585 = vst [vmem:[#allocation1] ss:$2 sm:$0xff] %v580
        %v586 = vld.sshfl [vmem:[#allocation1] sm:$0xff pattern:$0x75316420]
        %v587 = vld.sshfl [vmem:[#allocation1 + $0x8] sm:$0xff pattern:$0x75316420]
        %588 = vrot.lane.b32.xlu0 %v586, 108
        %v589 = vpop.permute.xlu0 %588
        %590 = vrot.lane.b32.xlu0 %v587, 108
        %v591 = vpop.permute.xlu0 %590
        %vm592 = vcmask 883712
        %v593 = vsel %vm592, %v589, %v591
        %v595 = vsel %vm241, %v582, 0
        %v598 = vsel %vm241, %v583, 0
        %v600 = vsel %vm248, %v593, 0
        %v602 = vsel %vm248, %v591, 0
        %604 = vmatpush.msra.mxu0 0.0
        %605 = vmatpush.msra.mxu0 0.0
        %606 = vmatpush.msra.mxu0 0.0
        %607 = vmatpush.msra.mxu0 0.0
        %608 = vmatpush.msra.mxu0 0.0
        %609 = vmatpush.msra.mxu0 0.0
        %610 = vmatpush.msra.mxu0 0.0
        %611 = vmatpush.msra.mxu0 0.0
        %612 = vmatpush.msra.mxu0 0.0
        %613 = vmatpush.msra.mxu0 0.0
        %614 = vmatpush.msra.mxu0 0.0
        %615 = vmatpush.msra.mxu0 0.0
        %616 = vmatpush.msra.mxu0 0.0
        %617 = vmatpush.msra.mxu0 0.0
        %618 = vmatpush.msra.mxu0 0.0
        %619 = vmatpush.msra.mxu0 %v600
        %620 = vmatmul.f32.gmra.mxu0 %v595
        %v621 = vpop.f32.mrf.mxu0
        %v622 = vadd.f32 0.0, %v621
        %623 = vmatmul.f32.gmra.mxu0 %v598
        %v624 = vpop.f32.mrf.mxu0
        %v625 = vadd.f32 0.0, %v624
        %626 = vdwg.mxu0
        %627 = vmatpush.msra.mxu0 0.0
        %628 = vmatpush.msra.mxu0 0.0
        %629 = vmatpush.msra.mxu0 0.0
        %630 = vmatpush.msra.mxu0 0.0
        %631 = vmatpush.msra.mxu0 0.0
        %632 = vmatpush.msra.mxu0 0.0
        %633 = vmatpush.msra.mxu0 0.0
        %634 = vmatpush.msra.mxu0 0.0
        %635 = vmatpush.msra.mxu0 0.0
        %636 = vmatpush.msra.mxu0 0.0
        %637 = vmatpush.msra.mxu0 0.0
        %638 = vmatpush.msra.mxu0 0.0
        %639 = vmatpush.msra.mxu0 0.0
        %640 = vmatpush.msra.mxu0 0.0
        %641 = vmatpush.msra.mxu0 0.0
        %642 = vmatpush.msra.mxu0 %v602
        %643 = vmatmul.f32.gmra.mxu0 %v595
        %v644 = vpop.f32.mrf.mxu0
        %v645 = vadd.f32 0.0, %v644
        %646 = vmatmul.f32.gmra.mxu0 %v598
        %v647 = vpop.f32.mrf.mxu0
        %v648 = vadd.f32 0.0, %v647
        %649 = vdwg.mxu0
        %v650 = vadd.f32 %v576, %v622
        %v651 = vadd.f32 %v577, %v645
        %v652 = vadd.f32 %v578, %v625
        %v653 = vadd.f32 %v579, %v648
        %v654 = vld [vmem:[%s224] sm:$0xff]
        %s655 = scalar_lea.vmem %s1, 96
        %v656 = vld [vmem:[%s655] sm:$0xff]
        %v657 = vld [vmem:[%s655 + $0x8] sm:$0xff]
        %659 = vst [vmem:[#allocation1] ss:$2 sm:$0xff] %v654
        %v660 = vld.sshfl [vmem:[#allocation1] sm:$0xff pattern:$0x75316420]
        %v661 = vld.sshfl [vmem:[#allocation1 + $0x8] sm:$0xff pattern:$0x75316420]
        %662 = vrot.lane.b32.xlu0 %v660, 92
        %v663 = vpop.permute.xlu0 %662
        %664 = vrot.lane.b32.xlu0 %v661, 92
        %v665 = vpop.permute.xlu0 %664
        %vm666 = vcmask 752640
        %v667 = vsel %vm666, %v663, %v665
        %v669 = vsel %vm241, %v656, 0
        %v672 = vsel %vm241, %v657, 0
        %v674 = vsel %vm248, %v667, 0
        %v676 = vsel %vm248, %v665, 0
        %678 = vmatpush.msra.mxu0 0.0
        %679 = vmatpush.msra.mxu0 0.0
        %680 = vmatpush.msra.mxu0 0.0
        %681 = vmatpush.msra.mxu0 0.0
        %682 = vmatpush.msra.mxu0 0.0
        %683 = vmatpush.msra.mxu0 0.0
        %684 = vmatpush.msra.mxu0 0.0
        %685 = vmatpush.msra.mxu0 0.0
        %686 = vmatpush.msra.mxu0 0.0
        %687 = vmatpush.msra.mxu0 0.0
        %688 = vmatpush.msra.mxu0 0.0
        %689 = vmatpush.msra.mxu0 0.0
        %690 = vmatpush.msra.mxu0 0.0
        %691 = vmatpush.msra.mxu0 0.0
        %692 = vmatpush.msra.mxu0 0.0
        %693 = vmatpush.msra.mxu0 %v674
        %694 = vmatmul.f32.gmra.mxu0 %v669
        %v695 = vpop.f32.mrf.mxu0
        %v696 = vadd.f32 0.0, %v695
        %697 = vmatmul.f32.gmra.mxu0 %v672
        %v698 = vpop.f32.mrf.mxu0
        %v699 = vadd.f32 0.0, %v698
        %700 = vdwg.mxu0
        %701 = vmatpush.msra.mxu0 0.0
        %702 = vmatpush.msra.mxu0 0.0
        %703 = vmatpush.msra.mxu0 0.0
        %704 = vmatpush.msra.mxu0 0.0
        %705 = vmatpush.msra.mxu0 0.0
        %706 = vmatpush.msra.mxu0 0.0
        %707 = vmatpush.msra.mxu0 0.0
        %708 = vmatpush.msra.mxu0 0.0
        %709 = vmatpush.msra.mxu0 0.0
        %710 = vmatpush.msra.mxu0 0.0
        %711 = vmatpush.msra.mxu0 0.0
        %712 = vmatpush.msra.mxu0 0.0
        %713 = vmatpush.msra.mxu0 0.0
        %714 = vmatpush.msra.mxu0 0.0
        %715 = vmatpush.msra.mxu0 0.0
        %716 = vmatpush.msra.mxu0 %v676
        %717 = vmatmul.f32.gmra.mxu0 %v669
        %v718 = vpop.f32.mrf.mxu0
        %v719 = vadd.f32 0.0, %v718
        %720 = vmatmul.f32.gmra.mxu0 %v672
        %v721 = vpop.f32.mrf.mxu0
        %v722 = vadd.f32 0.0, %v721
        %723 = vdwg.mxu0
        %v724 = vadd.f32 %v650, %v696
        %v725 = vadd.f32 %v651, %v719
        %v726 = vadd.f32 %v652, %v699
        %v727 = vadd.f32 %v653, %v722
        %v728 = vld [vmem:[%s224] sm:$0xff]
        %s729 = scalar_lea.vmem %s1, 112
        %v730 = vld [vmem:[%s729] sm:$0xff]
        %v731 = vld [vmem:[%s729 + $0x8] sm:$0xff]
        %733 = vst [vmem:[#allocation1] ss:$2 sm:$0xff] %v728
        %v734 = vld.sshfl [vmem:[#allocation1] sm:$0xff pattern:$0x75316420]
        %v735 = vld.sshfl [vmem:[#allocation1 + $0x8] sm:$0xff pattern:$0x75316420]
        %736 = vrot.lane.b32.xlu0 %v734, 91
        %v737 = vpop.permute.xlu0 %736
        %738 = vrot.lane.b32.xlu0 %v735, 91
        %v739 = vpop.permute.xlu0 %738
        %vm740 = vcmask 744448
        %v741 = vsel %vm740, %v737, %v739
        %v743 = vsel %vm241, %v730, 0
        %v746 = vsel %vm241, %v731, 0
        %v748 = vsel %vm248, %v741, 0
        %v750 = vsel %vm248, %v739, 0
        %752 = vmatpush.msra.mxu0 0.0
        %753 = vmatpush.msra.mxu0 0.0
        %754 = vmatpush.msra.mxu0 0.0
        %755 = vmatpush.msra.mxu0 0.0
        %756 = vmatpush.msra.mxu0 0.0
        %757 = vmatpush.msra.mxu0 0.0
        %758 = vmatpush.msra.mxu0 0.0
        %759 = vmatpush.msra.mxu0 0.0
        %760 = vmatpush.msra.mxu0 0.0
        %761 = vmatpush.msra.mxu0 0.0
        %762 = vmatpush.msra.mxu0 0.0
        %763 = vmatpush.msra.mxu0 0.0
        %764 = vmatpush.msra.mxu0 0.0
        %765 = vmatpush.msra.mxu0 0.0
        %766 = vmatpush.msra.mxu0 0.0
        %767 = vmatpush.msra.mxu0 %v748
        %768 = vmatmul.f32.gmra.mxu0 %v743
        %v769 = vpop.f32.mrf.mxu0
        %v770 = vadd.f32 0.0, %v769
        %771 = vmatmul.f32.gmra.mxu0 %v746
        %v772 = vpop.f32.mrf.mxu0
        %v773 = vadd.f32 0.0, %v772
        %774 = vdwg.mxu0
        %775 = vmatpush.msra.mxu0 0.0
        %776 = vmatpush.msra.mxu0 0.0
        %777 = vmatpush.msra.mxu0 0.0
        %778 = vmatpush.msra.mxu0 0.0
        %779 = vmatpush.msra.mxu0 0.0
        %780 = vmatpush.msra.mxu0 0.0
        %781 = vmatpush.msra.mxu0 0.0
        %782 = vmatpush.msra.mxu0 0.0
        %783 = vmatpush.msra.mxu0 0.0
        %784 = vmatpush.msra.mxu0 0.0
        %785 = vmatpush.msra.mxu0 0.0
        %786 = vmatpush.msra.mxu0 0.0
        %787 = vmatpush.msra.mxu0 0.0
        %788 = vmatpush.msra.mxu0 0.0
        %789 = vmatpush.msra.mxu0 0.0
        %790 = vmatpush.msra.mxu0 %v750
        %791 = vmatmul.f32.gmra.mxu0 %v743
        %v792 = vpop.f32.mrf.mxu0
        %v793 = vadd.f32 0.0, %v792
        %794 = vmatmul.f32.gmra.mxu0 %v746
        %v795 = vpop.f32.mrf.mxu0
        %v796 = vadd.f32 0.0, %v795
        %797 = vdwg.mxu0
        %v798 = vadd.f32 %v724, %v770
        %v799 = vadd.f32 %v725, %v793
        %v800 = vadd.f32 %v726, %v773
        %v801 = vadd.f32 %v727, %v796
        %v802 = vld [vmem:[%s224] sm:$0xff]
        %s803 = scalar_lea.vmem %s1, 128
        %v804 = vld [vmem:[%s803] sm:$0xff]
        %v805 = vld [vmem:[%s803 + $0x8] sm:$0xff]
        %807 = vst [vmem:[#allocation1] ss:$2 sm:$0xff] %v802
        %v808 = vld.sshfl [vmem:[#allocation1] sm:$0xff pattern:$0x75316420]
        %v809 = vld.sshfl [vmem:[#allocation1 + $0x8] sm:$0xff pattern:$0x75316420]
        %810 = vrot.lane.b32.xlu0 %v808, 90
        %v811 = vpop.permute.xlu0 %810
        %812 = vrot.lane.b32.xlu0 %v809, 90
        %v813 = vpop.permute.xlu0 %812
        %vm814 = vcmask 736256
        %v815 = vsel %vm814, %v811, %v813
        %v817 = vsel %vm241, %v804, 0
        %v820 = vsel %vm241, %v805, 0
        %v822 = vsel %vm248, %v815, 0
        %v824 = vsel %vm248, %v813, 0
        %826 = vmatpush.msra.mxu0 0.0
        %827 = vmatpush.msra.mxu0 0.0
        %828 = vmatpush.msra.mxu0 0.0
        %829 = vmatpush.msra.mxu0 0.0
        %830 = vmatpush.msra.mxu0 0.0
        %831 = vmatpush.msra.mxu0 0.0
        %832 = vmatpush.msra.mxu0 0.0
        %833 = vmatpush.msra.mxu0 0.0
        %834 = vmatpush.msra.mxu0 0.0
        %835 = vmatpush.msra.mxu0 0.0
        %836 = vmatpush.msra.mxu0 0.0
        %837 = vmatpush.msra.mxu0 0.0
        %838 = vmatpush.msra.mxu0 0.0
        %839 = vmatpush.msra.mxu0 0.0
        %840 = vmatpush.msra.mxu0 0.0
        %841 = vmatpush.msra.mxu0 %v822
        %842 = vmatmul.f32.gmra.mxu0 %v817
        %v843 = vpop.f32.mrf.mxu0
        %v844 = vadd.f32 0.0, %v843
        %845 = vmatmul.f32.gmra.mxu0 %v820
        %v846 = vpop.f32.mrf.mxu0
        %v847 = vadd.f32 0.0, %v846
        %848 = vdwg.mxu0
        %849 = vmatpush.msra.mxu0 0.0
        %850 = vmatpush.msra.mxu0 0.0
        %851 = vmatpush.msra.mxu0 0.0
        %852 = vmatpush.msra.mxu0 0.0
        %853 = vmatpush.msra.mxu0 0.0
        %854 = vmatpush.msra.mxu0 0.0
        %855 = vmatpush.msra.mxu0 0.0
        %856 = vmatpush.msra.mxu0 0.0
        %857 = vmatpush.msra.mxu0 0.0
        %858 = vmatpush.msra.mxu0 0.0
        %859 = vmatpush.msra.mxu0 0.0
        %860 = vmatpush.msra.mxu0 0.0
        %861 = vmatpush.msra.mxu0 0.0
        %862 = vmatpush.msra.mxu0 0.0
        %863 = vmatpush.msra.mxu0 0.0
        %864 = vmatpush.msra.mxu0 %v824
        %865 = vmatmul.f32.gmra.mxu0 %v817
        %v866 = vpop.f32.mrf.mxu0
        %v867 = vadd.f32 0.0, %v866
        %868 = vmatmul.f32.gmra.mxu0 %v820
        %v869 = vpop.f32.mrf.mxu0
        %v870 = vadd.f32 0.0, %v869
        %871 = vdwg.mxu0
        %v872 = vadd.f32 %v798, %v844
        %v873 = vadd.f32 %v799, %v867
        %v874 = vadd.f32 %v800, %v847
        %v875 = vadd.f32 %v801, %v870
        %v876 = vld [vmem:[%s2] sm:$0xff]
        %v877 = vld [vmem:[%s2 + $0x8] sm:$0xff]
        %879 = vset.pattern.permute.xlu0 0
        %880 = vperm.xlu0 %879, %v876
        %v881 = vpop.permute.xlu0 %880
        %884 = vset.pattern.permute.xlu0 0
        %885 = vperm.xlu0 %884, %v877
        %v886 = vpop.permute.xlu0 %885
        %v888 = vadd.f32 %v872, %v881
        %v889 = vadd.f32 %v873, %v881
        %v890 = vadd.f32 %v874, %v886
        %v891 = vadd.f32 %v875, %v886
        %s892 = sld [smem:[#allocation2]]
        %vm893 = vcmp.ge.f32.partialorder %v888, 0.0
        %vm894 = vcmp.ge.f32.partialorder %v889, 0.0
        %vm895 = vcmp.ge.f32.partialorder %v890, 0.0
        %vm896 = vcmp.ge.f32.partialorder %v891, 0.0
        %v897 = vstv %s892
        %v898 = vmul.f32 %v897, %v888
        %v899 = vmul.f32 %v897, %v889
        %v900 = vmul.f32 %v897, %v890
        %v901 = vmul.f32 %v897, %v891
        %v902 = vsel %vm893, %v888, %v898
        %v903 = vsel %vm894, %v889, %v899
        %v904 = vsel %vm895, %v890, %v900
        %v905 = vsel %vm896, %v891, %v901
        %906 = vst [vmem:[%s215] sm:$0xff] %v902
        %vm907 = vcmask 130048
        %908 = vst.msk [vmem:[%s215 + $0x8] sm:$0xff] %vm907, %v903
        %909 = vst [vmem:[%s215 + $0x10] sm:$0xff] %v904
        %910 = vst.msk [vmem:[%s215 + $0x18] sm:$0xff] %vm907, %v905
        %s911 = sand.u32 %s132, 1
        %s912 = scalar_lea.sflag [#allocation4], %s911
        %s913 = sand.u32 %s132, 1
        %s914 = smul.addr %s913, 32
        %s915 = scalar_lea.vmem [#allocation3], %s914
        // Predicated region
        $region37: #{tpu_custom_call.1} parent=35 // pred_check
          %p916 = pneg %p142
        $region38: #{tpu_custom_call.1} parent=35 // pred_check_branch
          %918 = sbr.rel (%p916) target = $region40
        $region39: #{tpu_custom_call.1} parent=35 // pred_region
          %920 = vsyncadd %s912, 0
          %s921 = smul.addr %s24, 4
          %s922 = smul.addr %s23, 8
          %s923 = sadd.s32 %s921, %s922
          %s924 = smul.addr %s923, 8
          %s925 = scalar_lea.hbm %s4, %s924
          %s926 = sshll.u32 %s915, 4
          %s927 = int_to_ptr.vmem [resolvable:$true] %s926
          %s928 = sshll.u32 %s925, 4
          %s929 = int_to_ptr.hbm [resolvable:$true] %s928
          %934 = dma.vmem_to_hbm [thread:$0]  %s927, 512, %s929, %s912, 256, 256, 16
        $region40: #{tpu_custom_call.1} parent=35 // pred_fallthru
          _
      $region36: #{tpu_custom_call.1} parent=5 // pred_fallthru
        _
      %p935 = scmp.le.s32.totalorder 2, %s14
      // Predicated region
      $region41: #{tpu_custom_call.1} parent=5 // pred_check
        %p936 = pneg %p935
      $region42: #{tpu_custom_call.1} parent=5 // pred_check_branch
        %938 = sbr.rel (%p936) target = $region44
      $region43: #{tpu_custom_call.1} parent=5 // pred_region
        %s939 = ssub.s32 %s14, 2
        // Predicated region
        $region45: #{tpu_custom_call.1} parent=43 // pred_check
          %p940 = pneg %p148
        $region46: #{tpu_custom_call.1} parent=43 // pred_check_branch
          %942 = sbr.rel (%p940) target = $region48
        $region47: #{tpu_custom_call.1} parent=43 // pred_region
          %s943 = sand.u32 %s133, 1
          %s944 = scalar_lea.sflag [#allocation4], %s943
          %s945 = sand.u32 %s133, 1
          %s946 = smul.addr %s945, 32
          %s947 = scalar_lea.vmem [#allocation3], %s946
          %949 = dma.done %s944, 512
        $region48: #{tpu_custom_call.1} parent=43 // pred_fallthru
          _
      $region44: #{tpu_custom_call.1} parent=5 // pred_fallthru
        _
    $region6: #{tpu_custom_call.1} parent=1 // loop_footer
      %s18 = sadd.s32 1, %s14
    $region7: #{tpu_custom_call.1} parent=1 // loop_footer_branch
      %13 = sbr.rel target = $region3
    $region8: #{tpu_custom_call.1} parent=1 // loop_exit
      _
    %950 = vsyncpa [#allocation4], 1
    %s951 = scalar_lea.sflag [#allocation4], 1
    %952 = vsyncpa %s951, 1

</llo_original>
